<compile_context>
chip_gen: v5e
topology: v5e:2x2
jax: 0.10.0
libtpu: 0.0.40
codegen_flags: <defaults>
</compile_context>

<pallas_src>
import jax
import jax.numpy as jnp
from jax.experimental import pallas as pl
from jax.experimental.pallas import tpu as pltpu


_LANE_CANDIDATES = (1024, 512, 256, 128)  # lane-dense last dims (multiples of 128)
_MAX_TILE_BYTES = 4 << 20                 # 4 MiB per pipeline buffer
_ROW_QUANTUM = 32                         # sublane quantum safe for f32/bf16/8-bit packing
_SPLIT_MIN_ROWS = 64                      # split into >=2 grid steps above this (v7x dual-TC)
_FALLBACK_BLOCK = 128 * 1024              # elements per block on the 1-D ragged fallback
_VMEM_LIMIT_BYTES = 32 << 20              # explicit scoped-VMEM budget (fits v5e/v6e/v7x)


def _round_up(x: int, m: int) -> int:
    return ((x + m - 1) // m) * m


def _negation_kernel(logic_ref, out_ref):
    # Exact elementwise reciprocal (matches PyTorch `1.0 / logic`, including
    # inf on zeros).  Memory-bound, so no approx-EUP reciprocal.
    out_ref[...] = 1.0 / logic_ref[...]


def _compiler_params():
    return pltpu.CompilerParams(
        # Independent tiles: shard across TensorCores on v7x, neutral on
        # single-TC v5e/v6e.
        dimension_semantics=("parallel",),
        vmem_limit_bytes=_VMEM_LIMIT_BYTES,
    )


def _cost_estimate(n: int, itemsize: int):
    # Memory-bound elementwise op: n divides, 0 transcendentals, 1R + 1W.
    return pl.CostEstimate(flops=n, transcendentals=0,
                           bytes_accessed=2 * n * itemsize)


def negation(logic: jax.Array) -> jax.Array:
    """Pallas implementation of Negation.forward: returns 1.0 / logic."""
    orig_shape = logic.shape
    dtype = logic.dtype

    # PyTorch semantics: 1.0 / int_tensor produces a float tensor.
    if not jnp.issubdtype(dtype, jnp.floating):
        logic = logic.astype(jnp.float32)
        dtype = jnp.float32

    n = logic.size
    if n == 0:
        return logic

    itemsize = jnp.dtype(dtype).itemsize
    flat = logic.reshape(-1)  # zero-copy (contiguous)

    # Largest lane-dense (multiple of 128) last dim that divides n exactly,
    # so the 2-D view is a zero-copy reshape (no padding / concatenation).
    lanes = next((l for l in _LANE_CANDIDATES if n % l == 0), None)

    if lanes is not None:
        rows = n // lanes
        x2d = flat.reshape(rows, lanes)  # zero-copy

        max_tile_rows = max(
            _ROW_QUANTUM,
            (_MAX_TILE_BYTES // (lanes * itemsize)) // _ROW_QUANTUM * _ROW_QUANTUM,
        )
        if rows < _SPLIT_MIN_ROWS:
            # Tiny input: one block covering the whole array (block dims equal
            # to the array dims are always legal).
            tile_rows = rows
        else:
            # >= 2 roughly even grid steps so v7x can use both TensorCores,
            # capped at the VMEM-friendly tile size.  No row padding: Pallas
            # masks the partial final block.
            tile_rows = min(max_tile_rows,
                            _round_up(pl.cdiv(rows, 2), _ROW_QUANTUM))

        grid = (pl.cdiv(rows, tile_rows),)

        out = pl.pallas_call(
            _negation_kernel,
            out_shape=jax.ShapeDtypeStruct((rows, lanes), dtype),
            grid_spec=pl.GridSpec(
                grid=grid,
                in_specs=[pl.BlockSpec((tile_rows, lanes), lambda i: (i, 0))],
                out_specs=pl.BlockSpec((tile_rows, lanes), lambda i: (i, 0)),
            ),
            compiler_params=_compiler_params(),
            cost_estimate=_cost_estimate(n, itemsize),
        )(x2d)
        return out.reshape(orig_shape)  # zero-copy

    # Ragged fallback (n not a multiple of 128): run a 1-D kernel over the
    # flat array.  Still zero extra HBM traffic (no pad/slice/concat); the
    # block is either a multiple of 128 or the full array length, and the
    # partial final block (if any) is masked by Pallas.
    if n <= _FALLBACK_BLOCK:
        block = n
    else:
        block = _FALLBACK_BLOCK
    grid = (pl.cdiv(n, block),)

    out = pl.pallas_call(
        _negation_kernel,
        out_shape=jax.ShapeDtypeStruct((n,), dtype),
        grid_spec=pl.GridSpec(
            grid=grid,
            in_specs=[pl.BlockSpec((block,), lambda i: (i,))],
            out_specs=pl.BlockSpec((block,), lambda i: (i,)),
        ),
        compiler_params=_compiler_params(),
        cost_estimate=_cost_estimate(n, itemsize),
    )(flat)
    return out.reshape(orig_shape)


if __name__ == "__main__":
    key = jax.random.PRNGKey(0)

    # 1) Small shape consistent with BetaE-style logic embeddings:
    #    (batch=2, num=4, hidden=32).  Values strictly positive (logic
    #    activations live in (0, 1]), avoiding div-by-zero.
    logic = jax.random.uniform(key, (2, 4, 32), dtype=jnp.float32,
                               minval=0.1, maxval=1.0)
    out = jax.block_until_ready(negation(logic))
    assert out.shape == logic.shape and out.dtype == logic.dtype
    assert jnp.allclose(out, 1.0 / logic, rtol=1e-6, atol=1e-6)

    # 2) Lane-dense (1024-aligned) zero-copy path.
    logic2 = jax.random.uniform(jax.random.PRNGKey(0), (8, 16, 256),
                                dtype=jnp.float32, minval=0.1, maxval=1.0)
    out2 = jax.block_until_ready(negation(logic2))
    assert jnp.allclose(out2, 1.0 / logic2, rtol=1e-6, atol=1e-6)

    # 3) Multi-tile grid with a masked partial final row-block (rows=100,
    #    tile_rows=64) — exercises the no-padding path.
    logic3 = jax.random.uniform(jax.random.PRNGKey(0), (100, 1024),
                                dtype=jnp.float32, minval=0.1, maxval=1.0)
    out3 = jax.block_until_ready(negation(logic3))
    assert jnp.allclose(out3, 1.0 / logic3, rtol=1e-6, atol=1e-6)

    # 4) Ragged total (105 elements) — exercises the 1-D fallback path.
    logic4 = jax.random.uniform(jax.random.PRNGKey(0), (3, 5, 7),
                                dtype=jnp.float32, minval=0.1, maxval=1.0)
    out4 = jax.block_until_ready(negation(logic4))
    assert jnp.allclose(out4, 1.0 / logic4, rtol=1e-6, atol=1e-6)

    # 5) bf16 dtype preservation.
    logic5 = jax.random.uniform(jax.random.PRNGKey(0), (4, 8, 128),
                                dtype=jnp.bfloat16, minval=0.1, maxval=1.0)
    out5 = jax.block_until_ready(negation(logic5))
    assert out5.dtype == jnp.bfloat16
    assert jnp.allclose(out5.astype(jnp.float32),
                        (1.0 / logic5).astype(jnp.float32),
                        rtol=1e-2, atol=1e-2)

    print("KERNEL_OK")
</pallas_src>

<mosaic_0001>
module attributes {stable_mosaic.version = 11 : i64} {
  func.func @_negation_kernel(%arg0: i32, %arg1: memref<1x256xf32, #tpu.memory_space<vmem>>, %arg2: memref<1x256xf32, #tpu.memory_space<vmem>>) attributes {dimension_semantics = [#tpu.dimension_semantics<parallel>], iteration_bounds = array<i64: 1>, scalar_prefetch = 0 : i64, scratch_operands = 0 : i64, tpu.core_type = #tpu.core_type<tc>, window_params = [{transform_indices = @transform_0, window_bounds = array<i64: 1, 256>}, {transform_indices = @transform_1, window_bounds = array<i64: 1, 256>}]} {
    %c0 = arith.constant 0 : index
    %c0_0 = arith.constant 0 : index
    %0 = vector.load %arg1[%c0, %c0_0] : memref<1x256xf32, #tpu.memory_space<vmem>>, vector<1x256xf32>
    %cst = arith.constant 1.000000e+00 : f32
    %1 = vector.broadcast %cst : f32 to vector<1x256xf32>
    %2 = arith.divf %1, %0 : vector<1x256xf32>
    %c0_1 = arith.constant 0 : index
    %c0_2 = arith.constant 0 : index
    %3 = vector.load %arg2[%c0_1, %c0_2] : memref<1x256xf32, #tpu.memory_space<vmem>>, vector<1x256xf32>
    tpu.vector_store %arg2[%c0_1, %c0_2], %2 {strides = array<i32>} : memref<1x256xf32, #tpu.memory_space<vmem>>, vector<1x256xf32>,
    return
  }
  func.func @transform_0(%arg0: i32) -> (i32, i32) {
    %c0_i32 = arith.constant 0 : i32
    %c0_i32_0 = arith.constant 0 : i32
    return %arg0, %c0_i32 : i32, i32
  }
  func.func @transform_1(%arg0: i32) -> (i32, i32) {
    %c0_i32 = arith.constant 0 : i32
    %c0_i32_0 = arith.constant 0 : i32
    return %arg0, %c0_i32 : i32, i32
  }
}

</mosaic_0001>

<llo_original>
// kernel: tpu_custom_call.1
$region0: #{tpu_custom_call.1}
  #allocation0 [shape = 'u32[]', space=smem, size = 0x4, offset = 0x4, fixed_abs, tag = 'smem constant byte address 0x4 - core index']
  #allocation1 [shape = 'u32[72,128]{1,0:T(1,128)}', space=vmem, size = 0x9000, scoped, tag = 'internal scratch']
  %s0 = inlined_call_operand.hbm [shape: f32[1,256], index: 0, kind: input, shape index: {}]
  %s1 = inlined_call_operand.hbm [shape: f32[1,256], index: 1, kind: output, shape index: {}]
  %s2 = sld [smem:[#allocation0]]
  $region18: #{tpu_custom_call.1} parent=0
    _
  %s4 = ssub.s32 1, %s2
  %s5 = scalar_select 0, %s4, %s2
  $region1: #{tpu_custom_call.1} parent=0
    #allocation2 [shape = 'u8[1024]{0}', space=vmem, size = 0x400, scoped, tag = 'input window, operand 0, single buffered']
    #allocation3 [shape = 's32[1]{0}', space=sflag, size = 0x4, scoped, tag = 'scoped memory for tpu_custom_call.1']
    #allocation4 [shape = 's32[1]{0}', space=sflag, size = 0x4, scoped, tag = 'scoped memory for tpu_custom_call.1']
    #allocation5 [shape = 'u8[1024]{0}', space=vmem, size = 0x400, scoped, tag = 'output window, operand 0, single buffered']
    %6 = vsyncpa [#allocation3], 0
    %7 = vsyncpa [#allocation4], 0
    // Predicated region
    $region2: #{tpu_custom_call.1} parent=1 // pred_check
      _
    $region3: #{tpu_custom_call.1} parent=1 // pred_check_branch
      %9 = sbr.rel (0) target = $region5
    $region4: #{tpu_custom_call.1} parent=1 // pred_region
      %11 = vsyncadd [#allocation3], 0
      %s13 = sshll.u32 %s0, 4
      %s14 = int_to_ptr.hbm [resolvable:$true] %s13
      %s15 = sshll.u32 [#allocation2], 4
      %s16 = int_to_ptr.vmem [resolvable:$true] %s15
      %18 = dma.hbm_to_vmem [thread:$0]  %s14, 32, %s16, [#allocation3]
    $region5: #{tpu_custom_call.1} parent=1 // pred_fallthru
      _
    // Predicated region
    $region6: #{tpu_custom_call.1} parent=1 // pred_check
      _
    $region7: #{tpu_custom_call.1} parent=1 // pred_check_branch
      %20 = sbr.rel (0) target = $region9
    $region8: #{tpu_custom_call.1} parent=1 // pred_region
      %22 = dma.done [#allocation3], 32
    $region9: #{tpu_custom_call.1} parent=1 // pred_fallthru
      _
    %v23 = vld [vmem:[#allocation2] sm:$0x3]
    %v24 = vrcp.pop %v23
    %v25 = vmul.f32 %v23, %v24
    %v26 = vsub.f32 1.0, %v25
    %v27 = vmul.f32 %v24, %v26
    %v28 = vadd.f32 %v24, %v27
    %vm29 = vweird.f32 %v23
    %vm30 = vweird.f32 %v24
    %vm31 = vmor %vm29, %vm30
    %v32 = vsel %vm31, %v24, %v28
    %v33 = vand.u32 2147483647, %v23
    %vm34 = vcmp.eq.f32.partialorder %v33, 8.507059e+37
    %v35 = vand.u32 %v23, 2147483648
    %v36 = vor.u32 1.1754944e-38, %v35
    %v37 = vsel %vm34, %v36, %v32
    %v38 = vmul.f32 1.0, %v37
    %v39 = vlaneseq
    %vm40 = vcmp.ge.s32.totalorder %v39, 0
    %vm41 = vcmp.lt.s32.totalorder %v39, 256
    %vm42 = vmand %vm40, %vm41
    %43 = vst.msk [vmem:[#allocation5] sm:$0x3] %vm42, %v38
    // Predicated region
    $region10: #{tpu_custom_call.1} parent=1 // pred_check
      _
    $region11: #{tpu_custom_call.1} parent=1 // pred_check_branch
      %45 = sbr.rel (0) target = $region13
    $region12: #{tpu_custom_call.1} parent=1 // pred_region
      %47 = vsyncadd [#allocation4], 0
      %s49 = sshll.u32 [#allocation5], 4
      %s50 = int_to_ptr.vmem [resolvable:$true] %s49
      %s51 = sshll.u32 %s1, 4
      %s52 = int_to_ptr.hbm [resolvable:$true] %s51
      %54 = dma.vmem_to_hbm [thread:$0]  %s50, 32, %s52, [#allocation4]
    $region13: #{tpu_custom_call.1} parent=1 // pred_fallthru
      _
    // Predicated region
    $region14: #{tpu_custom_call.1} parent=1 // pred_check
      _
    $region15: #{tpu_custom_call.1} parent=1 // pred_check_branch
      %56 = sbr.rel (0) target = $region17
    $region16: #{tpu_custom_call.1} parent=1 // pred_region
      %58 = dma.done [#allocation4], 32
    $region17: #{tpu_custom_call.1} parent=1 // pred_fallthru
      _
    %59 = vsyncpa [#allocation3], 1
    %60 = vsyncpa [#allocation4], 1

</llo_original>
